<compile_context>
chip_gen: v7x
topology: tpu7x:2x2x1
jax: 0.10.0
libtpu: 0.0.40
codegen_flags: <defaults>
</compile_context>

<pallas_src>
import math

import jax
import jax.numpy as jnp
import numpy as np
from jax.experimental import pallas as pl
from jax.experimental.pallas import tpu as pltpu

_VMEM_LIMIT_BYTES = 48 * 1024 * 1024     # explicit scoped limit; < v7x 64 MiB/TC
_BLOCK_BUDGET_BYTES = 28 * 1024 * 1024   # double-buffered block data per step


# --------------------------------------------------------------------------- #
# Selection-matrix helpers (host-side numpy, trace-time constants)
# --------------------------------------------------------------------------- #
def _nearest_src_indices(in_size: int, out_size: int) -> np.ndarray:
    return (np.arange(out_size) * in_size) // out_size


def _nearest_selection_matrix(in_size: int, out_size: int) -> np.ndarray:
    """S[j, i] = 1 iff output j reads input i.  Shape (out_size, in_size)."""
    sel = np.zeros((out_size, in_size), dtype=np.float32)
    sel[np.arange(out_size), _nearest_src_indices(in_size, out_size)] = 1.0
    return sel


def _sublane_multiple(dtype) -> int:
    # 8 for f32, 16 for bf16, 32 for int8/fp8.
    return max(8, 32 // jnp.dtype(dtype).itemsize)


# --------------------------------------------------------------------------- #
# Fast path: integer H upscale -> single selection matmul over row slabs
# --------------------------------------------------------------------------- #
def _choose_group(total_src_rows, W_in, r_h, W_out, itemsize):
    """Smallest divisor g of total_src_rows making k_out (and ideally k_in)
    lane-dense multiples of 128, under VMEM caps.  Returns None if even g=1
    violates the caps (caller falls back to the general path)."""
    best_g, best_score = None, -1
    limit = min(total_src_rows, 1024)
    for g in range(1, limit + 1):
        if total_src_rows % g:
            continue
        k_in = g * W_in
        k_out = g * r_h * W_out
        if k_in > 8192 or k_in * k_out * itemsize > (8 << 20):
            break                      # monotone in g: larger divisors also fail
        score = 2 * int(k_out % 128 == 0) + int(k_in % 128 == 0)
        if score > best_score:
            best_g, best_score = g, score
        if score == 3:                 # both lane-dense at the smallest such g
            break
    return best_g


def _pick_row_block(n_rows, bytes_per_row, sel_bytes, sub):
    """Rows per grid step: as large as the (double-buffered) VMEM budget allows,
    sublane-multiple, preferring an exact divisor of n_rows (no ragged block)."""
    budget = max(2 * 1024 * 1024, _BLOCK_BUDGET_BYTES - 2 * sel_bytes)
    per_row = 2 * bytes_per_row                      # double-buffered in + out
    tr = max(sub, budget // max(1, per_row))
    # Keep >= 4 grid steps (>= 2 per v7x TensorCore) when there is plenty of
    # work, but never shrink a block below ~2 MiB just to add steps.
    min_split_rows = max(sub, (2 * 1024 * 1024) // max(1, bytes_per_row))
    if n_rows >= 4 * min_split_rows:
        tr = min(tr, -(-n_rows // 4))
    if tr >= n_rows:
        return n_rows
    tr = max(sub, (tr // sub) * sub)
    # Prefer a tr that divides n_rows exactly, but don't shrink by more than 2x.
    cand = tr
    while cand >= max(sub, tr // 2):
        if n_rows % cand == 0:
            return cand
        cand -= sub
    return tr                                        # ragged last block is masked


def _select_matmul_kernel(x_ref, sel_ref, o_ref):
    # x: (tr, k_in) @ sel: (k_in, k_out) -> o: (tr, k_out).
    # SEL has 0/1 entries, so the matmul is an exact copy/duplicate of inputs.
    o_ref[...] = jnp.dot(
        x_ref[...], sel_ref[...], preferred_element_type=jnp.float32
    ).astype(o_ref.dtype)


def _interp_fast(x, N, C, H_in, W_in, H_out, W_out, g, dtype, itemsize, sub):
    r_h = H_out // H_in
    total_src_rows = N * C * H_in
    k_in = g * W_in
    k_out = g * r_h * W_out
    n_rows = total_src_rows // g                     # exact (g | total_src_rows)

    # SEL[(p*W_in+wi), (q*W_out+wo)] = 1 iff slab-local output row q / col wo
    # reads slab-local input row p / col wi.
    sel_np = np.kron(
        _nearest_selection_matrix(g, g * r_h).T,     # (g, g*r_h)
        _nearest_selection_matrix(W_in, W_out).T,    # (W_in, W_out)
    )
    sel = jnp.asarray(sel_np, dtype=dtype)           # (k_in, k_out)
    sel_bytes = k_in * k_out * itemsize

    x2 = x.reshape(n_rows, k_in)                     # free, contiguous reshape

    tr = _pick_row_block(n_rows, (k_in + k_out) * itemsize, sel_bytes, sub)

    out2d = pl.pallas_call(
        _select_matmul_kernel,
        out_shape=jax.ShapeDtypeStruct((n_rows, k_out), dtype),
        grid=(pl.cdiv(n_rows, tr),),
        in_specs=[
            pl.BlockSpec((tr, k_in), lambda i: (i, 0)),
            pl.BlockSpec((k_in, k_out), lambda i: (0, 0)),   # constant block
        ],
        out_specs=pl.BlockSpec((tr, k_out), lambda i: (i, 0)),
        compiler_params=pltpu.CompilerParams(
            dimension_semantics=("parallel",),
            vmem_limit_bytes=_VMEM_LIMIT_BYTES,
        ),
    )(x2, sel)

    # n_rows * k_out == N*C*H_out*W_out exactly: free reshape, no slicing.
    return out2d.reshape(N, C, H_out, W_out)


# --------------------------------------------------------------------------- #
# General path: separable selection  y = S_h @ x_plane @ S_w^T  per plane
# --------------------------------------------------------------------------- #
def _make_separable_kernel(tb):
    def kernel(x_ref, selh_ref, selw_ref, o_ref):
        # x: (tb, H_in, W_in); selh: (H_out, H_in); selw: (W_in, W_out)
        selh = selh_ref[...]
        selw = selw_ref[...]
        for b in range(tb):                          # static unroll, tb <= 16
            # Row (H) selection then column (W) selection; both are exact
            # copies, so the intermediate can stay in the input dtype.
            t = jnp.dot(selh, x_ref[b],
                        preferred_element_type=jnp.float32).astype(x_ref.dtype)
            o_ref[b] = jnp.dot(t, selw,
                               preferred_element_type=jnp.float32
                               ).astype(o_ref.dtype)
    return kernel


def _interp_general(x, N, C, H_in, W_in, H_out, W_out, dtype, itemsize):
    nc = N * C
    selh = jnp.asarray(_nearest_selection_matrix(H_in, H_out), dtype=dtype)    # (H_out, H_in)
    selw = jnp.asarray(_nearest_selection_matrix(W_in, W_out).T, dtype=dtype)  # (W_in, W_out)

    per_plane = (H_in * W_in + H_out * W_out) * itemsize
    sel_bytes = (H_out * H_in + W_in * W_out) * itemsize
    budget = max(2 * 1024 * 1024, _BLOCK_BUDGET_BYTES - 2 * sel_bytes)
    tb = int(max(1, min(nc, 16, budget // max(1, 2 * per_plane))))
    # TODO(synk): for planes too large to double-buffer whole (e.g. 4k x 4k
    # downsampling), add an inner grid axis tiling the plane over H_out rows.

    x3 = x.reshape(nc, H_in, W_in)                   # free, contiguous reshape

    out3 = pl.pallas_call(
        _make_separable_kernel(tb),
        out_shape=jax.ShapeDtypeStruct((nc, H_out, W_out), dtype),
        grid=(pl.cdiv(nc, tb),),
        in_specs=[
            pl.BlockSpec((tb, H_in, W_in), lambda i: (i, 0, 0)),
            pl.BlockSpec((H_out, H_in), lambda i: (0, 0)),
            pl.BlockSpec((W_in, W_out), lambda i: (0, 0)),
        ],
        out_specs=pl.BlockSpec((tb, H_out, W_out), lambda i: (i, 0, 0)),
        compiler_params=pltpu.CompilerParams(
            dimension_semantics=("parallel",),
            vmem_limit_bytes=_VMEM_LIMIT_BYTES,
        ),
    )(x3, selh, selw)

    return out3.reshape(N, C, H_out, W_out)


# --------------------------------------------------------------------------- #
# Public wrapper: equivalent of Interpolate(out_dims, mode='nearest')(x), NCHW
# --------------------------------------------------------------------------- #
def interpolate_nearest(x: jax.Array, out_dims) -> jax.Array:
    N, C, H_in, W_in = x.shape
    if isinstance(out_dims, (tuple, list)):
        H_out, W_out = int(out_dims[0]), int(out_dims[1])
    else:
        H_out = W_out = int(out_dims)

    orig_dtype = x.dtype
    if not jnp.issubdtype(orig_dtype, jnp.floating):
        # v7x MXU has no integer path; the selection matmul is exact in f32
        # for integer magnitudes < 2**24.
        x = x.astype(jnp.float32)
    dtype = x.dtype
    itemsize = jnp.dtype(dtype).itemsize
    sub = _sublane_multiple(dtype)

    if H_out == H_in and W_out == W_in:
        return x.astype(orig_dtype)

    out = None
    if H_out % H_in == 0:
        g = _choose_group(N * C * H_in, W_in, H_out // H_in, W_out, itemsize)
        if g is not None:
            out = _interp_fast(x, N, C, H_in, W_in, H_out, W_out, g,
                               dtype, itemsize, sub)
    if out is None:
        out = _interp_general(x, N, C, H_in, W_in, H_out, W_out,
                              dtype, itemsize)
    return out.astype(orig_dtype)


# --------------------------------------------------------------------------- #
if __name__ == "__main__":
    key = jax.random.PRNGKey(0)
    N, C, H, W = 2, 4, 16, 16
    x = jax.random.normal(key, (N, C, H, W), dtype=jnp.float32)
    x_np = np.asarray(x)

    def _ref(xn, out_dims):
        idx_h = (np.arange(out_dims[0]) * xn.shape[2]) // out_dims[0]
        idx_w = (np.arange(out_dims[1]) * xn.shape[3]) // out_dims[1]
        return xn[:, :, idx_h][:, :, :, idx_w]

    # Fast path: integer upscale 16x16 -> 32x32 (g=8 -> k_in=128, k_out=512:
    # lane-dense loads AND stores, no padding, no epilogue copy).
    out_dims = (32, 32)
    y = jax.block_until_ready(interpolate_nearest(x, out_dims))
    np.testing.assert_allclose(np.asarray(y), _ref(x_np, out_dims),
                               rtol=1e-6, atol=1e-6)

    # General path: non-integer H ratio 16 -> 24 (separable S_h / S_w, no kron).
    out_dims2 = (24, 32)
    y2 = jax.block_until_ready(interpolate_nearest(x, out_dims2))
    np.testing.assert_allclose(np.asarray(y2), _ref(x_np, out_dims2),
                               rtol=1e-6, atol=1e-6)

    print("KERNEL_OK")
</pallas_src>

<mosaic_0001>
module attributes {stable_mosaic.version = 11 : i64} {
  func.func @_select_matmul_kernel(%arg0: i32, %arg1: memref<16x128xf32, #tpu.memory_space<vmem>>, %arg2: memref<128x512xf32, #tpu.memory_space<vmem>>, %arg3: memref<16x512xf32, #tpu.memory_space<vmem>>) attributes {dimension_semantics = [#tpu.dimension_semantics<parallel>], iteration_bounds = array<i64: 1>, scalar_prefetch = 0 : i64, scratch_operands = 0 : i64, tpu.core_type = #tpu.core_type<tc>, window_params = [{transform_indices = @transform_0, window_bounds = array<i64: 16, 128>}, {pipeline_mode = #tpu.pipeline_mode<synchronous>, transform_indices = @transform_1, window_bounds = array<i64: 128, 512>}, {transform_indices = @transform_2, window_bounds = array<i64: 16, 512>}]} {
    %c0 = arith.constant 0 : index
    %c0_0 = arith.constant 0 : index
    %0 = vector.load %arg1[%c0, %c0_0] : memref<16x128xf32, #tpu.memory_space<vmem>>, vector<16x128xf32>
    %c0_1 = arith.constant 0 : index
    %c0_2 = arith.constant 0 : index
    %1 = vector.load %arg2[%c0_1, %c0_2] : memref<128x512xf32, #tpu.memory_space<vmem>>, vector<128x512xf32>
    %cst = arith.constant dense<0.000000e+00> : vector<16x512xf32>
    %2 = tpu.matmul %0, %1, %cst {dimension_numbers = #tpu.dot_dimension_numbers<[1], [0], [0], [1], [0, 0, 1, 1], [], []>} : vector<16x128xf32>, vector<128x512xf32>, vector<16x512xf32> -> vector<16x512xf32>
    %c0_3 = arith.constant 0 : index
    %c0_4 = arith.constant 0 : index
    %3 = vector.load %arg3[%c0_3, %c0_4] : memref<16x512xf32, #tpu.memory_space<vmem>>, vector<16x512xf32>
    tpu.vector_store %arg3[%c0_3, %c0_4], %2 {strides = array<i32>} : memref<16x512xf32, #tpu.memory_space<vmem>>, vector<16x512xf32>,
    return
  }
  func.func @transform_0(%arg0: i32) -> (i32, i32) {
    %c0_i32 = arith.constant 0 : i32
    %c0_i32_0 = arith.constant 0 : i32
    return %arg0, %c0_i32 : i32, i32
  }
  func.func @transform_1(%arg0: i32) -> (i32, i32) {
    %c0_i32 = arith.constant 0 : i32
    %c0_i32_0 = arith.constant 0 : i32
    %c0_i32_1 = arith.constant 0 : i32
    return %c0_i32, %c0_i32_0 : i32, i32
  }
  func.func @transform_2(%arg0: i32) -> (i32, i32) {
    %c0_i32 = arith.constant 0 : i32
    %c0_i32_0 = arith.constant 0 : i32
    return %arg0, %c0_i32 : i32, i32
  }
}

</mosaic_0001>

<llo_original>
// kernel: tpu_custom_call.1
$region0: #{tpu_custom_call.1}
  #allocation0 [shape = 'u32[]', space=smem, size = 0x4, offset = 0x4, fixed_abs, tag = 'smem constant byte address 0x4 - core index']
  #allocation1 [shape = 'u32[144,128]{1,0:T(1,128)}', space=vmem, size = 0x12000, scoped, tag = 'internal scratch']
  %s0 = inlined_call_operand.hbm [shape: f32[16,128], index: 0, kind: input, shape index: {}]
  %s1 = inlined_call_operand.hbm [shape: f32[128,512], index: 1, kind: input, shape index: {}]
  %s2 = inlined_call_operand.hbm [shape: f32[16,512], index: 2, kind: output, shape index: {}]
  %s3 = sld [smem:[#allocation0]]
  $region26: #{tpu_custom_call.1} parent=0
    _
  %s5 = ssub.s32 1, %s3
  %s6 = scalar_select 0, %s5, %s3
  $region1: #{tpu_custom_call.1} parent=0
    #allocation2 [shape = 'u8[8192]{0}', space=vmem, size = 0x2000, scoped, tag = 'input window, operand 0, single buffered']
    #allocation3 [shape = 's32[1]{0}', space=sflag, size = 0x4, scoped, tag = 'scoped memory for tpu_custom_call.1']
    #allocation4 [shape = 's32[1]{0}', space=sflag, size = 0x4, scoped, tag = 'scoped memory for tpu_custom_call.1']
    #allocation5 [shape = 'u8[262144]{0}', space=vmem, size = 0x40000, scoped, tag = 'input window, operand 1, single buffered']
    #allocation6 [shape = 's32[1]{0}', space=sflag, size = 0x4, scoped, tag = 'scoped memory for tpu_custom_call.1']
    #allocation7 [shape = 'u8[32768]{0}', space=vmem, size = 0x8000, scoped, tag = 'output window, operand 0, single buffered']
    %7 = vsyncpa [#allocation3], 0
    %8 = vsyncpa [#allocation6], 0
    %9 = vsyncpa [#allocation4], 0
    // Predicated region
    $region2: #{tpu_custom_call.1} parent=1 // pred_check
      _
    $region3: #{tpu_custom_call.1} parent=1 // pred_check_branch
      %11 = sbr.rel (0) target = $region5
    $region4: #{tpu_custom_call.1} parent=1 // pred_region
      %s13 = ssub.s32 256, 256
      %14 = vsyncadd [#allocation3], %s13
      %s15 = sshll.u32 [#allocation2], 4
      %s16 = int_to_ptr.vmem [resolvable:$true] %s15
      %21 = dma.hbm_to_vmem [thread:$0]  %s0, 256, %s16, [#allocation3], 128, 128, 8
    $region5: #{tpu_custom_call.1} parent=1 // pred_fallthru
      _
    // Predicated region
    $region6: #{tpu_custom_call.1} parent=1 // pred_check
      _
    $region7: #{tpu_custom_call.1} parent=1 // pred_check_branch
      %23 = sbr.rel (0) target = $region9
    $region8: #{tpu_custom_call.1} parent=1 // pred_region
      %s25 = ssub.s32 8192, 8192
      %26 = vsyncadd [#allocation6], %s25
      %s27 = sshll.u32 [#allocation5], 4
      %s28 = int_to_ptr.vmem [resolvable:$true] %s27
      %33 = dma.hbm_to_vmem [thread:$0]  %s1, 8192, %s28, [#allocation6], 512, 512, 32
    $region9: #{tpu_custom_call.1} parent=1 // pred_fallthru
      _
    // Predicated region
    $region10: #{tpu_custom_call.1} parent=1 // pred_check
      _
    $region11: #{tpu_custom_call.1} parent=1 // pred_check_branch
      %35 = sbr.rel (0) target = $region13
    $region12: #{tpu_custom_call.1} parent=1 // pred_region
      %36 = dma.done [#allocation3], 256
    $region13: #{tpu_custom_call.1} parent=1 // pred_fallthru
      _
    // Predicated region
    $region14: #{tpu_custom_call.1} parent=1 // pred_check
      _
    $region15: #{tpu_custom_call.1} parent=1 // pred_check_branch
      %38 = sbr.rel (0) target = $region17
    $region16: #{tpu_custom_call.1} parent=1 // pred_region
      %39 = dma.done [#allocation6], 8192
    $region17: #{tpu_custom_call.1} parent=1 // pred_fallthru
      _
    %v40 = vld [vmem:[#allocation2] sm:$0xff]
    %v41 = vld [vmem:[#allocation2 + $0x8] sm:$0xff]
    %v42 = vld [vmem:[#allocation5] sm:$0xff]
    %v43 = vld [vmem:[#allocation5 + $0x8] sm:$0xff]
    %v44 = vld [vmem:[#allocation5 + $0x10] sm:$0xff]
    %v45 = vld [vmem:[#allocation5 + $0x18] sm:$0xff]
    %v46 = vld [vmem:[#allocation5 + $0x20] sm:$0xff]
    %v47 = vld [vmem:[#allocation5 + $0x28] sm:$0xff]
    %v48 = vld [vmem:[#allocation5 + $0x30] sm:$0xff]
    %v49 = vld [vmem:[#allocation5 + $0x38] sm:$0xff]
    %v50 = vld [vmem:[#allocation5 + $0x40] sm:$0xff]
    %v51 = vld [vmem:[#allocation5 + $0x48] sm:$0xff]
    %v52 = vld [vmem:[#allocation5 + $0x50] sm:$0xff]
    %v53 = vld [vmem:[#allocation5 + $0x58] sm:$0xff]
    %v54 = vld [vmem:[#allocation5 + $0x60] sm:$0xff]
    %v55 = vld [vmem:[#allocation5 + $0x68] sm:$0xff]
    %v56 = vld [vmem:[#allocation5 + $0x70] sm:$0xff]
    %v57 = vld [vmem:[#allocation5 + $0x78] sm:$0xff]
    %v58 = vld [vmem:[#allocation5 + $0x80] sm:$0xff]
    %v59 = vld [vmem:[#allocation5 + $0x88] sm:$0xff]
    %v60 = vld [vmem:[#allocation5 + $0x90] sm:$0xff]
    %v61 = vld [vmem:[#allocation5 + $0x98] sm:$0xff]
    %v62 = vld [vmem:[#allocation5 + $0xa0] sm:$0xff]
    %v63 = vld [vmem:[#allocation5 + $0xa8] sm:$0xff]
    %v64 = vld [vmem:[#allocation5 + $0xb0] sm:$0xff]
    %v65 = vld [vmem:[#allocation5 + $0xb8] sm:$0xff]
    %v66 = vld [vmem:[#allocation5 + $0xc0] sm:$0xff]
    %v67 = vld [vmem:[#allocation5 + $0xc8] sm:$0xff]
    %v68 = vld [vmem:[#allocation5 + $0xd0] sm:$0xff]
    %v69 = vld [vmem:[#allocation5 + $0xd8] sm:$0xff]
    %v70 = vld [vmem:[#allocation5 + $0xe0] sm:$0xff]
    %v71 = vld [vmem:[#allocation5 + $0xe8] sm:$0xff]
    %v72 = vld [vmem:[#allocation5 + $0xf0] sm:$0xff]
    %v73 = vld [vmem:[#allocation5 + $0xf8] sm:$0xff]
    %v74 = vld [vmem:[#allocation5 + $0x100] sm:$0xff]
    %v75 = vld [vmem:[#allocation5 + $0x108] sm:$0xff]
    %v76 = vld [vmem:[#allocation5 + $0x110] sm:$0xff]
    %v77 = vld [vmem:[#allocation5 + $0x118] sm:$0xff]
    %v78 = vld [vmem:[#allocation5 + $0x120] sm:$0xff]
    %v79 = vld [vmem:[#allocation5 + $0x128] sm:$0xff]
    %v80 = vld [vmem:[#allocation5 + $0x130] sm:$0xff]
    %v81 = vld [vmem:[#allocation5 + $0x138] sm:$0xff]
    %v82 = vld [vmem:[#allocation5 + $0x140] sm:$0xff]
    %v83 = vld [vmem:[#allocation5 + $0x148] sm:$0xff]
    %v84 = vld [vmem:[#allocation5 + $0x150] sm:$0xff]
    %v85 = vld [vmem:[#allocation5 + $0x158] sm:$0xff]
    %v86 = vld [vmem:[#allocation5 + $0x160] sm:$0xff]
    %v87 = vld [vmem:[#allocation5 + $0x168] sm:$0xff]
    %v88 = vld [vmem:[#allocation5 + $0x170] sm:$0xff]
    %v89 = vld [vmem:[#allocation5 + $0x178] sm:$0xff]
    %v90 = vld [vmem:[#allocation5 + $0x180] sm:$0xff]
    %v91 = vld [vmem:[#allocation5 + $0x188] sm:$0xff]
    %v92 = vld [vmem:[#allocation5 + $0x190] sm:$0xff]
    %v93 = vld [vmem:[#allocation5 + $0x198] sm:$0xff]
    %v94 = vld [vmem:[#allocation5 + $0x1a0] sm:$0xff]
    %v95 = vld [vmem:[#allocation5 + $0x1a8] sm:$0xff]
    %v96 = vld [vmem:[#allocation5 + $0x1b0] sm:$0xff]
    %v97 = vld [vmem:[#allocation5 + $0x1b8] sm:$0xff]
    %v98 = vld [vmem:[#allocation5 + $0x1c0] sm:$0xff]
    %v99 = vld [vmem:[#allocation5 + $0x1c8] sm:$0xff]
    %v100 = vld [vmem:[#allocation5 + $0x1d0] sm:$0xff]
    %v101 = vld [vmem:[#allocation5 + $0x1d8] sm:$0xff]
    %v102 = vld [vmem:[#allocation5 + $0x1e0] sm:$0xff]
    %v103 = vld [vmem:[#allocation5 + $0x1e8] sm:$0xff]
    %v104 = vld [vmem:[#allocation5 + $0x1f0] sm:$0xff]
    %v105 = vld [vmem:[#allocation5 + $0x1f8] sm:$0xff]
    %106 = vmatprep.subr.mxu0 %v43
    %107 = vmatpush1.msra.mxu0 %v42
    %108 = vmatprep.subr.mxu0 %v47
    %109 = vmatpush1.msra.mxu0 %v46
    %110 = vmatprep.subr.mxu0 %v51
    %111 = vmatpush1.msra.mxu0 %v50
    %112 = vmatprep.subr.mxu0 %v55
    %113 = vmatpush1.msra.mxu0 %v54
    %114 = vmatprep.subr.mxu0 %v59
    %115 = vmatpush1.msra.mxu0 %v58
    %116 = vmatprep.subr.mxu0 %v63
    %117 = vmatpush1.msra.mxu0 %v62
    %118 = vmatprep.subr.mxu0 %v67
    %119 = vmatpush1.msra.mxu0 %v66
    %120 = vmatprep.subr.mxu0 %v71
    %121 = vmatpush1.msra.mxu0 %v70
    %122 = vmatprep.subr.mxu0 %v75
    %123 = vmatpush1.msra.mxu0 %v74
    %124 = vmatprep.subr.mxu0 %v79
    %125 = vmatpush1.msra.mxu0 %v78
    %126 = vmatprep.subr.mxu0 %v83
    %127 = vmatpush1.msra.mxu0 %v82
    %128 = vmatprep.subr.mxu0 %v87
    %129 = vmatpush1.msra.mxu0 %v86
    %130 = vmatprep.subr.mxu0 %v91
    %131 = vmatpush1.msra.mxu0 %v90
    %132 = vmatprep.subr.mxu0 %v95
    %133 = vmatpush1.msra.mxu0 %v94
    %134 = vmatprep.subr.mxu0 %v99
    %135 = vmatpush1.msra.mxu0 %v98
    %136 = vmatprep.subr.mxu0 %v103
    %137 = vmatpush1.msra.mxu0 %v102
    %138 = vmatprep.subr.mxu0 0.0
    %139 = vmatpush1.msra.mxu0 0.0
    %140 = vmatprep.subr.mxu0 0.0
    %141 = vmatpush1.msra.mxu0 0.0
    %142 = vmatprep.subr.mxu0 0.0
    %143 = vmatpush1.msra.mxu0 0.0
    %144 = vmatprep.subr.mxu0 0.0
    %145 = vmatpush1.msra.mxu0 0.0
    %146 = vmatprep.subr.mxu0 0.0
    %147 = vmatpush1.msra.mxu0 0.0
    %148 = vmatprep.subr.mxu0 0.0
    %149 = vmatpush1.msra.mxu0 0.0
    %150 = vmatprep.subr.mxu0 0.0
    %151 = vmatpush1.msra.mxu0 0.0
    %152 = vmatprep.subr.mxu0 0.0
    %153 = vmatpush1.msra.mxu0 0.0
    %154 = vmatprep.subr.mxu0 0.0
    %155 = vmatpush1.msra.mxu0 0.0
    %156 = vmatprep.subr.mxu0 0.0
    %157 = vmatpush1.msra.mxu0 0.0
    %158 = vmatprep.subr.mxu0 0.0
    %159 = vmatpush1.msra.mxu0 0.0
    %160 = vmatprep.subr.mxu0 0.0
    %161 = vmatpush1.msra.mxu0 0.0
    %162 = vmatprep.subr.mxu0 0.0
    %163 = vmatpush1.msra.mxu0 0.0
    %164 = vmatprep.subr.mxu0 0.0
    %165 = vmatpush1.msra.mxu0 0.0
    %166 = vmatprep.subr.mxu0 0.0
    %167 = vmatpush1.msra.mxu0 0.0
    %168 = vmatprep.subr.mxu0 0.0
    %169 = vmatpush1.msra.mxu0 0.0
    %170 = vmatprep.mubr.f32.mxu0 0.0
    %171 = vmatmul.mubr.f32.gmra.mrb[0].mxu0 %v40
    %v172 = vpop.f32.mrb[0].mxu0
    %v173 = vadd.f32 0.0, %v172
    %v174 = vpop.f32.mrb[0].mxu0
    %v175 = vadd.f32 0.0, %v174
    %176 = vmatprep.mubr.f32.mxu0 0.0
    %177 = vmatmul.mubr.f32.gmra.mrb[0].mxu0 %v41
    %v178 = vpop.f32.mrb[0].mxu0
    %v179 = vadd.f32 0.0, %v178
    %v180 = vpop.f32.mrb[0].mxu0
    %v181 = vadd.f32 0.0, %v180
    %182 = vdwg.mxu0
    %183 = vmatprep.subr.mxu0 %v45
    %184 = vmatpush1.msra.mxu0 %v44
    %185 = vmatprep.subr.mxu0 %v49
    %186 = vmatpush1.msra.mxu0 %v48
    %187 = vmatprep.subr.mxu0 %v53
    %188 = vmatpush1.msra.mxu0 %v52
    %189 = vmatprep.subr.mxu0 %v57
    %190 = vmatpush1.msra.mxu0 %v56
    %191 = vmatprep.subr.mxu0 %v61
    %192 = vmatpush1.msra.mxu0 %v60
    %193 = vmatprep.subr.mxu0 %v65
    %194 = vmatpush1.msra.mxu0 %v64
    %195 = vmatprep.subr.mxu0 %v69
    %196 = vmatpush1.msra.mxu0 %v68
    %197 = vmatprep.subr.mxu0 %v73
    %198 = vmatpush1.msra.mxu0 %v72
    %199 = vmatprep.subr.mxu0 %v77
    %200 = vmatpush1.msra.mxu0 %v76
    %201 = vmatprep.subr.mxu0 %v81
    %202 = vmatpush1.msra.mxu0 %v80
    %203 = vmatprep.subr.mxu0 %v85
    %204 = vmatpush1.msra.mxu0 %v84
    %205 = vmatprep.subr.mxu0 %v89
    %206 = vmatpush1.msra.mxu0 %v88
    %207 = vmatprep.subr.mxu0 %v93
    %208 = vmatpush1.msra.mxu0 %v92
    %209 = vmatprep.subr.mxu0 %v97
    %210 = vmatpush1.msra.mxu0 %v96
    %211 = vmatprep.subr.mxu0 %v101
    %212 = vmatpush1.msra.mxu0 %v100
    %213 = vmatprep.subr.mxu0 %v105
    %214 = vmatpush1.msra.mxu0 %v104
    %215 = vmatprep.subr.mxu0 0.0
    %216 = vmatpush1.msra.mxu0 0.0
    %217 = vmatprep.subr.mxu0 0.0
    %218 = vmatpush1.msra.mxu0 0.0
    %219 = vmatprep.subr.mxu0 0.0
    %220 = vmatpush1.msra.mxu0 0.0
    %221 = vmatprep.subr.mxu0 0.0
    %222 = vmatpush1.msra.mxu0 0.0
    %223 = vmatprep.subr.mxu0 0.0
    %224 = vmatpush1.msra.mxu0 0.0
    %225 = vmatprep.subr.mxu0 0.0
    %226 = vmatpush1.msra.mxu0 0.0
    %227 = vmatprep.subr.mxu0 0.0
    %228 = vmatpush1.msra.mxu0 0.0
    %229 = vmatprep.subr.mxu0 0.0
    %230 = vmatpush1.msra.mxu0 0.0
    %231 = vmatprep.subr.mxu0 0.0
    %232 = vmatpush1.msra.mxu0 0.0
    %233 = vmatprep.subr.mxu0 0.0
    %234 = vmatpush1.msra.mxu0 0.0
    %235 = vmatprep.subr.mxu0 0.0
    %236 = vmatpush1.msra.mxu0 0.0
    %237 = vmatprep.subr.mxu0 0.0
    %238 = vmatpush1.msra.mxu0 0.0
    %239 = vmatprep.subr.mxu0 0.0
    %240 = vmatpush1.msra.mxu0 0.0
    %241 = vmatprep.subr.mxu0 0.0
    %242 = vmatpush1.msra.mxu0 0.0
    %243 = vmatprep.subr.mxu0 0.0
    %244 = vmatpush1.msra.mxu0 0.0
    %245 = vmatprep.subr.mxu0 0.0
    %246 = vmatpush1.msra.mxu0 0.0
    %247 = vmatprep.mubr.f32.mxu0 0.0
    %248 = vmatmul.mubr.f32.gmra.mrb[0].mxu0 %v40
    %v249 = vpop.f32.mrb[0].mxu0
    %v250 = vadd.f32 0.0, %v249
    %v251 = vpop.f32.mrb[0].mxu0
    %v252 = vadd.f32 0.0, %v251
    %253 = vmatprep.mubr.f32.mxu0 0.0
    %254 = vmatmul.mubr.f32.gmra.mrb[0].mxu0 %v41
    %v255 = vpop.f32.mrb[0].mxu0
    %v256 = vadd.f32 0.0, %v255
    %v257 = vpop.f32.mrb[0].mxu0
    %v258 = vadd.f32 0.0, %v257
    %259 = vdwg.mxu0
    %260 = vst [vmem:[#allocation7] sm:$0xff] %v173
    %261 = vst [vmem:[#allocation7 + $0x8] sm:$0xff] %v175
    %262 = vst [vmem:[#allocation7 + $0x10] sm:$0xff] %v250
    %263 = vst [vmem:[#allocation7 + $0x18] sm:$0xff] %v252
    %264 = vst [vmem:[#allocation7 + $0x20] sm:$0xff] %v179
    %265 = vst [vmem:[#allocation7 + $0x28] sm:$0xff] %v181
    %266 = vst [vmem:[#allocation7 + $0x30] sm:$0xff] %v256
    %267 = vst [vmem:[#allocation7 + $0x38] sm:$0xff] %v258
    // Predicated region
    $region18: #{tpu_custom_call.1} parent=1 // pred_check
      _
    $region19: #{tpu_custom_call.1} parent=1 // pred_check_branch
      %269 = sbr.rel (0) target = $region21
    $region20: #{tpu_custom_call.1} parent=1 // pred_region
      %s271 = ssub.s32 1024, 1024
      %272 = vsyncadd [#allocation4], %s271
      %s273 = sshll.u32 [#allocation7], 4
      %s274 = int_to_ptr.vmem [resolvable:$true] %s273
      %279 = dma.vmem_to_hbm [thread:$0]  %s274, 1024, %s2, [#allocation4], 512, 512, 32
    $region21: #{tpu_custom_call.1} parent=1 // pred_fallthru
      _
    // Predicated region
    $region22: #{tpu_custom_call.1} parent=1 // pred_check
      _
    $region23: #{tpu_custom_call.1} parent=1 // pred_check_branch
      %281 = sbr.rel (0) target = $region25
    $region24: #{tpu_custom_call.1} parent=1 // pred_region
      %282 = dma.done [#allocation4], 1024
    $region25: #{tpu_custom_call.1} parent=1 // pred_fallthru
      _
    %283 = vsyncpa [#allocation3], 1
    %284 = vsyncpa [#allocation6], 1
    %285 = vsyncpa [#allocation4], 1

</llo_original>
